<compile_context>
chip_gen: v5e
topology: v5e:2x2
jax: 0.10.0
libtpu: 0.0.40
codegen_flags: <defaults>
</compile_context>

<pallas_src>
import functools
import math

import jax
import jax.numpy as jnp
from jax.experimental import pallas as pl
from jax.experimental.pallas import tpu as pltpu

FLOAT_MIN = float(jnp.finfo(jnp.float32).min)  # torch.finfo().min for float32


def _round_up(x: int, m: int) -> int:
    return (x + m - 1) // m * m


# ---------------------------------------------------------------------------
# Kernel body: one tile of batch elements per grid step.
# ---------------------------------------------------------------------------
def _attention_head_kernel(*refs, scale, compute_dtype, has_mask):
    if has_mask:
        q_ref, k_ref, v_ref, lm_ref, wq_ref, wk_ref, wv_ref, o_ref = refs
    else:
        q_ref, k_ref, v_ref, wq_ref, wk_ref, wv_ref, o_ref = refs
        lm_ref = None

    bt, sq, kd = q_ref.shape
    _, sk, vd = v_ref.shape
    dp = wq_ref.shape[1]  # padded model_dim (multiple of 128)

    # --- q/k/v projections on the flattened (B_TILE*seq, feature) slab ----------------
    # Weights arrive as (in_features, out_features_padded): no in-kernel transpose.
    q = jnp.dot(q_ref[...].reshape(bt * sq, kd), wq_ref[...],
                preferred_element_type=jnp.float32).reshape(bt, sq, dp)
    k = jnp.dot(k_ref[...].reshape(bt * sk, kd), wk_ref[...],
                preferred_element_type=jnp.float32).reshape(bt, sk, dp)
    v = jnp.dot(v_ref[...].reshape(bt * sk, vd), wv_ref[...],
                preferred_element_type=jnp.float32).reshape(bt, sk, dp)

    # --- scores: contract on the last dim of both operands (no transpose) -------------
    scores = jnp.einsum("bqd,bkd->bqk",
                        q.astype(compute_dtype), k.astype(compute_dtype),
                        preferred_element_type=jnp.float32)
    scores = scores * scale  # Python-constant 1/sqrt(k_dim)

    if lm_ref is not None:
        # Precomputed max(log(mask), FLOAT_MIN); (bt, Sq, 1) broadcasts over the key axis.
        scores = scores + lm_ref[...]

    # --- softmax over the QUERY axis (dim=1), in f32, as in torch.softmax(mul, 1) -----
    m = jnp.max(scores, axis=1, keepdims=True)
    e = jnp.exp(scores - m)
    denom = jnp.sum(e, axis=1, keepdims=True)
    p = e * pl.reciprocal(denom, approx=True)  # EUP reciprocal instead of a VPU divide

    out = jnp.einsum("bqk,bkd->bqd",
                     p.astype(compute_dtype), v.astype(compute_dtype),
                     preferred_element_type=jnp.float32)
    o_ref[...] = out.astype(o_ref.dtype)


# ---------------------------------------------------------------------------
# Wrapper
# ---------------------------------------------------------------------------
def attention_head(query, key, value, wq, wk, wv, mask=None, *,
                   compute_dtype=None, batch_tile=8):
    """Pallas implementation of AttentionHead.forward.

    query: (B, Sq, k_dim), key: (B, Sk, k_dim), value: (B, Sk, v_dim)
    wq/wk: (model_dim, k_dim), wv: (model_dim, v_dim)   (PyTorch nn.Linear layout)
    mask:  None, (B, Sq), or (B, Sq, Sk)

    compute_dtype: dtype of the MXU matmul operands (accumulation is always f32;
    scaling, mask-add and softmax are always f32). Pass jnp.bfloat16 on v6e/v7x.
    """
    B, Sq, k_dim = query.shape
    _, Sk, _ = key.shape
    v_dim = value.shape[-1]
    model_dim = wq.shape[0]
    out_dtype = query.dtype

    if compute_dtype is None:
        compute_dtype = query.dtype

    # Lane-dense output: pad out-features to a multiple of 128 with zero columns.
    # Zero columns contribute nothing to q@k^T and yield zero output columns, which are
    # sliced off below -> numerically exact.
    dp = _round_up(model_dim, 128)

    def prep_w(w):
        wt = jnp.transpose(w).astype(compute_dtype)  # (in, out): transposed once, outside the kernel
        if dp != model_dim:
            wt = jnp.pad(wt, ((0, 0), (0, dp - model_dim)))
        return wt

    wq_t, wk_t, wv_t = prep_w(wq), prep_w(wk), prep_w(wv)
    query_c = query.astype(compute_dtype)
    key_c = key.astype(compute_dtype)
    value_c = value.astype(compute_dtype)

    # Largest divisor of B that is <= batch_tile (several batch elements per grid step).
    bt = 1
    for cand in range(min(B, batch_tile), 0, -1):
        if B % cand == 0:
            bt = cand
            break
    grid = (B // bt,)

    q_spec = pl.BlockSpec((bt, Sq, k_dim), lambda b: (b, 0, 0))
    k_spec = pl.BlockSpec((bt, Sk, k_dim), lambda b: (b, 0, 0))
    v_spec = pl.BlockSpec((bt, Sk, v_dim), lambda b: (b, 0, 0))
    w_spec = lambda w: pl.BlockSpec(w.shape, lambda b: (0, 0))  # resident across all steps
    o_spec = pl.BlockSpec((bt, Sq, dp), lambda b: (b, 0, 0))
    out_shape = jax.ShapeDtypeStruct((B, Sq, dp), out_dtype)

    scale = 1.0 / math.sqrt(float(k_dim))

    c_itm = jnp.dtype(compute_dtype).itemsize
    o_itm = jnp.dtype(out_dtype).itemsize
    mask_block_bytes = 0

    if mask is None:
        has_mask = False
        in_specs = [q_spec, k_spec, v_spec, w_spec(wq_t), w_spec(wk_t), w_spec(wv_t)]
        args = (query_c, key_c, value_c, wq_t, wk_t, wv_t)
    else:
        has_mask = True
        # Precompute max(log(mask), FLOAT_MIN) once, outside the kernel, in f32.
        logm = jnp.maximum(jnp.log(mask.astype(jnp.float32)), FLOAT_MIN)
        if mask.ndim == query.ndim:              # already (B, Sq, Sk)-like
            logm = jnp.broadcast_to(logm, (B, Sq, Sk))
            lm_spec = pl.BlockSpec((bt, Sq, Sk), lambda b: (b, 0, 0))
            mask_block_bytes = bt * Sq * Sk * 4
        else:                                    # (B, Sq): keep compact, broadcast in-kernel
            logm = logm[..., None]               # (B, Sq, 1)
            lm_spec = pl.BlockSpec((bt, Sq, 1), lambda b: (b, 0, 0))
            mask_block_bytes = bt * Sq * 4
        in_specs = [q_spec, k_spec, v_spec, lm_spec,
                    w_spec(wq_t), w_spec(wk_t), w_spec(wv_t)]
        args = (query_c, key_c, value_c, logm, wq_t, wk_t, wv_t)

    # Explicit VMEM budget: double-buffered streamed blocks + resident weights
    # + f32 in-kernel intermediates + headroom.  Clamped to [16 MiB, 64 MiB] so it is
    # valid on v7x (64 MiB/TC) as well as v5e/v6e (128 MiB).
    streamed = ((bt * Sq * k_dim + bt * Sk * k_dim + bt * Sk * v_dim) * c_itm
                + bt * Sq * dp * o_itm + mask_block_bytes)
    resident = (2 * k_dim + v_dim) * dp * c_itm
    intermediates = bt * (Sq * dp + 2 * Sk * dp + 3 * Sq * Sk) * 4
    vmem_bytes = 2 * streamed + resident + intermediates + (4 << 20)
    vmem_limit = int(min(max(vmem_bytes, 16 << 20), 64 << 20))

    kernel = functools.partial(_attention_head_kernel, scale=scale,
                               compute_dtype=compute_dtype, has_mask=has_mask)

    out = pl.pallas_call(
        kernel,
        out_shape=out_shape,
        grid_spec=pltpu.PrefetchScalarGridSpec(
            num_scalar_prefetch=0,
            grid=grid,
            in_specs=in_specs,
            out_specs=o_spec,
        ),
        compiler_params=pltpu.CompilerParams(
            dimension_semantics=("parallel",),   # batch tiles shard across TCs on v7x
            vmem_limit_bytes=vmem_limit,
        ),
    )(*args)

    # TODO(synk): for very large Sq/Sk (esp. v7x, 64 MiB VMEM) add a second "arbitrary"
    # grid axis tiling Sk with an f32 accumulator for p_tile @ v_tile; the query-axis
    # softmax is independent per key column, so no cross-tile softmax state is needed.

    if dp != model_dim:
        out = out[..., :model_dim]  # drop the zero lane-padding columns
    return out


# ---------------------------------------------------------------------------
# Pure-JAX reference (mirrors the PyTorch module exactly) for validation
# ---------------------------------------------------------------------------
def _reference(query, key, value, wq, wk, wv, mask=None):
    k_dim = query.shape[-1]
    q = query @ wq.T
    k = key @ wk.T
    v = value @ wv.T
    s = jnp.einsum("bqd,bkd->bqk", q, k) / jnp.sqrt(jnp.float32(k_dim))
    if mask is not None:
        m = mask.astype(jnp.float32)
        if m.ndim != s.ndim:
            m = jnp.broadcast_to(m[..., None], s.shape)
        s = s + jnp.maximum(jnp.log(m), FLOAT_MIN)
    p = jax.nn.softmax(s, axis=1)  # softmax over the query axis, as in the module
    return jnp.einsum("bqk,bkd->bqd", p, v)


if __name__ == "__main__":
    # Small shapes implied by the forward: (batch, seq, feature) 3-D tensors.
    B, Sq, Sk = 4, 8, 8
    k_dim, v_dim, model_dim = 32, 16, 32

    root = jax.random.PRNGKey(0)
    ks = jax.random.split(root, 7)
    query = jax.random.normal(ks[0], (B, Sq, k_dim), jnp.float32)
    key_in = jax.random.normal(ks[1], (B, Sk, k_dim), jnp.float32)
    value = jax.random.normal(ks[2], (B, Sk, v_dim), jnp.float32)

    # nn.Linear(in, out, bias=False) -> weight (out, in).
    wq = jax.random.normal(ks[3], (model_dim, k_dim), jnp.float32) / math.sqrt(k_dim)
    wk = jax.random.normal(ks[4], (model_dim, k_dim), jnp.float32) / math.sqrt(k_dim)
    wv = jax.random.normal(ks[5], (model_dim, v_dim), jnp.float32) / math.sqrt(v_dim)

    mask = (jax.random.uniform(ks[6], (B, Sq)) > 0.3).astype(jnp.float32)

    # Unmasked, f32 compute (tolerance covers the EUP approx-reciprocal softmax norm).
    out = jax.block_until_ready(attention_head(query, key_in, value, wq, wk, wv))
    ref = _reference(query, key_in, value, wq, wk, wv)
    assert out.shape == (B, Sq, model_dim)
    assert jnp.allclose(out, ref, atol=1e-2, rtol=1e-2), "unmasked mismatch"

    # Masked (2-D mask -> compact (B, Sq, 1) log-mask, broadcast over the key axis in-kernel).
    out_m = jax.block_until_ready(attention_head(query, key_in, value, wq, wk, wv, mask=mask))
    ref_m = _reference(query, key_in, value, wq, wk, wv, mask=mask)
    assert jnp.allclose(out_m, ref_m, atol=1e-2, rtol=1e-2), "masked mismatch"

    # bf16 MXU operands with f32 accumulation (v6e/v7x fast path); looser tolerance.
    out_bf = jax.block_until_ready(
        attention_head(query, key_in, value, wq, wk, wv, mask=mask,
                       compute_dtype=jnp.bfloat16))
    assert jnp.allclose(out_bf, ref_m, atol=1e-1, rtol=1e-1), "bf16 mismatch"

    print("KERNEL_OK")
</pallas_src>

<mosaic_0001>
module attributes {stable_mosaic.version = 11 : i64} {
  func.func @_attention_head_kernel(%arg0: i32, %arg1: memref<4x8x32xf32, #tpu.memory_space<vmem>>, %arg2: memref<4x8x32xf32, #tpu.memory_space<vmem>>, %arg3: memref<4x8x16xf32, #tpu.memory_space<vmem>>, %arg4: memref<32x128xf32, #tpu.memory_space<vmem>>, %arg5: memref<32x128xf32, #tpu.memory_space<vmem>>, %arg6: memref<16x128xf32, #tpu.memory_space<vmem>>, %arg7: memref<4x8x128xf32, #tpu.memory_space<vmem>>) attributes {dimension_semantics = [#tpu.dimension_semantics<parallel>], iteration_bounds = array<i64: 1>, scalar_prefetch = 0 : i64, scratch_operands = 0 : i64, tpu.core_type = #tpu.core_type<tc>, window_params = [{transform_indices = @transform_0, window_bounds = array<i64: 4, 8, 32>}, {transform_indices = @transform_1, window_bounds = array<i64: 4, 8, 32>}, {transform_indices = @transform_2, window_bounds = array<i64: 4, 8, 16>}, {pipeline_mode = #tpu.pipeline_mode<synchronous>, transform_indices = @transform_3, window_bounds = array<i64: 32, 128>}, {pipeline_mode = #tpu.pipeline_mode<synchronous>, transform_indices = @transform_4, window_bounds = array<i64: 32, 128>}, {pipeline_mode = #tpu.pipeline_mode<synchronous>, transform_indices = @transform_5, window_bounds = array<i64: 16, 128>}, {transform_indices = @transform_6, window_bounds = array<i64: 4, 8, 128>}]} {
    %c0 = arith.constant 0 : index
    %c0_0 = arith.constant 0 : index
    %c0_1 = arith.constant 0 : index
    %0 = vector.load %arg1[%c0, %c0_0, %c0_1] : memref<4x8x32xf32, #tpu.memory_space<vmem>>, vector<4x8x32xf32>
    %1 = vector.shape_cast %0 : vector<4x8x32xf32> to vector<32x32xf32>
    %c0_2 = arith.constant 0 : index
    %c0_3 = arith.constant 0 : index
    %2 = vector.load %arg4[%c0_2, %c0_3] : memref<32x128xf32, #tpu.memory_space<vmem>>, vector<32x128xf32>
    %cst = arith.constant dense<0.000000e+00> : vector<32x128xf32>
    %3 = tpu.matmul %1, %2, %cst {dimension_numbers = #tpu.dot_dimension_numbers<[1], [0], [0], [1], [0, 0, 1, 1], [], []>} : vector<32x32xf32>, vector<32x128xf32>, vector<32x128xf32> -> vector<32x128xf32>
    %4 = vector.shape_cast %3 : vector<32x128xf32> to vector<4x8x128xf32>
    %c0_4 = arith.constant 0 : index
    %c0_5 = arith.constant 0 : index
    %c0_6 = arith.constant 0 : index
    %5 = vector.load %arg2[%c0_4, %c0_5, %c0_6] : memref<4x8x32xf32, #tpu.memory_space<vmem>>, vector<4x8x32xf32>
    %6 = vector.shape_cast %5 : vector<4x8x32xf32> to vector<32x32xf32>
    %c0_7 = arith.constant 0 : index
    %c0_8 = arith.constant 0 : index
    %7 = vector.load %arg5[%c0_7, %c0_8] : memref<32x128xf32, #tpu.memory_space<vmem>>, vector<32x128xf32>
    %cst_9 = arith.constant dense<0.000000e+00> : vector<32x128xf32>
    %8 = tpu.matmul %6, %7, %cst_9 {dimension_numbers = #tpu.dot_dimension_numbers<[1], [0], [0], [1], [0, 0, 1, 1], [], []>} : vector<32x32xf32>, vector<32x128xf32>, vector<32x128xf32> -> vector<32x128xf32>
    %9 = vector.shape_cast %8 : vector<32x128xf32> to vector<4x8x128xf32>
    %c0_10 = arith.constant 0 : index
    %c0_11 = arith.constant 0 : index
    %c0_12 = arith.constant 0 : index
    %10 = vector.load %arg3[%c0_10, %c0_11, %c0_12] : memref<4x8x16xf32, #tpu.memory_space<vmem>>, vector<4x8x16xf32>
    %11 = vector.shape_cast %10 : vector<4x8x16xf32> to vector<32x16xf32>
    %c0_13 = arith.constant 0 : index
    %c0_14 = arith.constant 0 : index
    %12 = vector.load %arg6[%c0_13, %c0_14] : memref<16x128xf32, #tpu.memory_space<vmem>>, vector<16x128xf32>
    %cst_15 = arith.constant dense<0.000000e+00> : vector<32x128xf32>
    %13 = tpu.matmul %11, %12, %cst_15 {dimension_numbers = #tpu.dot_dimension_numbers<[1], [0], [0], [1], [0, 0, 1, 1], [], []>} : vector<32x16xf32>, vector<16x128xf32>, vector<32x128xf32> -> vector<32x128xf32>
    %14 = vector.shape_cast %13 : vector<32x128xf32> to vector<4x8x128xf32>
    "tpu.trace_start"() <{level = 10 : i32, message = "bqd,bkd->bqk"}> : () -> ()
    %cst_16 = arith.constant dense<0.000000e+00> : vector<4x8x8xf32>
    %15 = tpu.matmul %4, %9, %cst_16 {dimension_numbers = #tpu.dot_dimension_numbers<[2], [2], [1], [1], [0, 0, 0, 1, 1, 1], [0], [0]>} : vector<4x8x128xf32>, vector<4x8x128xf32>, vector<4x8x8xf32> -> vector<4x8x8xf32>
    "tpu.trace_stop"() : () -> ()
    %cst_17 = arith.constant 0.176776692 : f32
    %16 = vector.broadcast %cst_17 : f32 to vector<4x8x8xf32>
    %17 = arith.mulf %15, %16 : vector<4x8x8xf32>
    %cst_18 = arith.constant dense<0xFF800000> : vector<4x8xf32>
    %18 = vector.multi_reduction <maximumf>, %17, %cst_18 [1] : vector<4x8x8xf32> to vector<4x8xf32>
    %19 = vector.shape_cast %18 : vector<4x8xf32> to vector<4x1x8xf32>
    %20 = vector.broadcast %19 : vector<4x1x8xf32> to vector<4x8x8xf32>
    %21 = arith.subf %17, %20 : vector<4x8x8xf32>
    %22 = math.exp %21 : vector<4x8x8xf32>
    %cst_19 = arith.constant dense<0.000000e+00> : vector<4x8xf32>
    %23 = vector.multi_reduction <add>, %22, %cst_19 [1] : vector<4x8x8xf32> to vector<4x8xf32>
    %24 = vector.shape_cast %23 : vector<4x8xf32> to vector<4x1x8xf32>
    %25 = tpu.reciprocal %24 {approx = true} : vector<4x1x8xf32> -> vector<4x1x8xf32>
    %26 = vector.broadcast %25 : vector<4x1x8xf32> to vector<4x8x8xf32>
    %27 = arith.mulf %22, %26 : vector<4x8x8xf32>
    "tpu.trace_start"() <{level = 10 : i32, message = "bqk,bkd->bqd"}> : () -> ()
    %cst_20 = arith.constant dense<0.000000e+00> : vector<4x8x128xf32>
    %28 = tpu.matmul %27, %14, %cst_20 {dimension_numbers = #tpu.dot_dimension_numbers<[2], [1], [1], [2], [0, 0, 0, 1, 1, 2], [0], [0]>} : vector<4x8x8xf32>, vector<4x8x128xf32>, vector<4x8x128xf32> -> vector<4x8x128xf32>
    "tpu.trace_stop"() : () -> ()
    %c0_21 = arith.constant 0 : index
    %c0_22 = arith.constant 0 : index
    %c0_23 = arith.constant 0 : index
    %29 = vector.load %arg7[%c0_21, %c0_22, %c0_23] : memref<4x8x128xf32, #tpu.memory_space<vmem>>, vector<4x8x128xf32>
    tpu.vector_store %arg7[%c0_21, %c0_22, %c0_23], %28 {strides = array<i32>} : memref<4x8x128xf32, #tpu.memory_space<vmem>>, vector<4x8x128xf32>,
    return
  }
  func.func @transform_0(%arg0: i32) -> (i32, i32, i32) {
    %c0_i32 = arith.constant 0 : i32
    %c0_i32_0 = arith.constant 0 : i32
    %c0_i32_1 = arith.constant 0 : i32
    return %arg0, %c0_i32, %c0_i32_0 : i32, i32, i32
  }
  func.func @transform_1(%arg0: i32) -> (i32, i32, i32) {
    %c0_i32 = arith.constant 0 : i32
    %c0_i32_0 = arith.constant 0 : i32
    %c0_i32_1 = arith.constant 0 : i32
    return %arg0, %c0_i32, %c0_i32_0 : i32, i32, i32
  }
  func.func @transform_2(%arg0: i32) -> (i32, i32, i32) {
    %c0_i32 = arith.constant 0 : i32
    %c0_i32_0 = arith.constant 0 : i32
    %c0_i32_1 = arith.constant 0 : i32
    return %arg0, %c0_i32, %c0_i32_0 : i32, i32, i32
  }
  func.func @transform_3(%arg0: i32) -> (i32, i32) {
    %c0_i32 = arith.constant 0 : i32
    %c0_i32_0 = arith.constant 0 : i32
    %c0_i32_1 = arith.constant 0 : i32
    return %c0_i32, %c0_i32_0 : i32, i32
  }
  func.func @transform_4(%arg0: i32) -> (i32, i32) {
    %c0_i32 = arith.constant 0 : i32
    %c0_i32_0 = arith.constant 0 : i32
    %c0_i32_1 = arith.constant 0 : i32
    return %c0_i32, %c0_i32_0 : i32, i32
  }
  func.func @transform_5(%arg0: i32) -> (i32, i32) {
    %c0_i32 = arith.constant 0 : i32
    %c0_i32_0 = arith.constant 0 : i32
    %c0_i32_1 = arith.constant 0 : i32
    return %c0_i32, %c0_i32_0 : i32, i32
  }
  func.func @transform_6(%arg0: i32) -> (i32, i32, i32) {
    %c0_i32 = arith.constant 0 : i32
    %c0_i32_0 = arith.constant 0 : i32
    %c0_i32_1 = arith.constant 0 : i32
    return %arg0, %c0_i32, %c0_i32_0 : i32, i32, i32
  }
}

</mosaic_0001>

<llo_original>
// kernel: tpu_custom_call.1
$region0: #{tpu_custom_call.1}
  #allocation0 [shape = 'u32[]', space=smem, size = 0x4, offset = 0x4, fixed_abs, tag = 'smem constant byte address 0x4 - core index']
  #allocation1 [shape = 'u32[72,128]{1,0:T(1,128)}', space=vmem, size = 0x9000, scoped, tag = 'internal scratch']
  %s0 = inlined_call_operand.hbm [shape: f32[4,8,32], index: 0, kind: input, shape index: {}]
  %s1 = inlined_call_operand.hbm [shape: f32[4,8,32], index: 1, kind: input, shape index: {}]
  %s2 = inlined_call_operand.hbm [shape: f32[4,8,16], index: 2, kind: input, shape index: {}]
  %s3 = inlined_call_operand.hbm [shape: f32[32,128], index: 3, kind: input, shape index: {}]
  %s4 = inlined_call_operand.hbm [shape: f32[32,128], index: 4, kind: input, shape index: {}]
  %s5 = inlined_call_operand.hbm [shape: f32[16,128], index: 5, kind: input, shape index: {}]
  %s6 = inlined_call_operand.hbm [shape: f32[4,8,128], index: 6, kind: output, shape index: {}]
  %s7 = sld [smem:[#allocation0]]
  $region58: #{tpu_custom_call.1} parent=0
    _
  %s9 = ssub.s32 1, %s7
  %s10 = scalar_select 0, %s9, %s7
  $region1: #{tpu_custom_call.1} parent=0
    #allocation2 [shape = 'u8[16384]{0}', space=vmem, size = 0x4000, scoped, tag = 'input window, operand 0, single buffered']
    #allocation3 [shape = 's32[1]{0}', space=sflag, size = 0x4, scoped, tag = 'scoped memory for tpu_custom_call.1']
    #allocation4 [shape = 's32[1]{0}', space=sflag, size = 0x4, scoped, tag = 'scoped memory for tpu_custom_call.1']
    #allocation5 [shape = 'u8[16384]{0}', space=vmem, size = 0x4000, scoped, tag = 'input window, operand 1, single buffered']
    #allocation6 [shape = 's32[1]{0}', space=sflag, size = 0x4, scoped, tag = 'scoped memory for tpu_custom_call.1']
    #allocation7 [shape = 'u8[16384]{0}', space=vmem, size = 0x4000, scoped, tag = 'input window, operand 2, single buffered']
    #allocation8 [shape = 'u8[16384]{0}', space=vmem, size = 0x4000, scoped, tag = 'input window, operand 3, single buffered']
    #allocation9 [shape = 's32[1]{0}', space=sflag, size = 0x4, scoped, tag = 'scoped memory for tpu_custom_call.1']
    #allocation10 [shape = 'u8[16384]{0}', space=vmem, size = 0x4000, scoped, tag = 'input window, operand 4, single buffered']
    #allocation11 [shape = 'u8[8192]{0}', space=vmem, size = 0x2000, scoped, tag = 'input window, operand 5, single buffered']
    #allocation12 [shape = 's32[1]{0}', space=sflag, size = 0x4, scoped, tag = 'scoped memory for tpu_custom_call.1']
    #allocation13 [shape = 'u8[16384]{0}', space=vmem, size = 0x4000, scoped, tag = 'output window, operand 0, single buffered']
    %11 = vsyncpa [#allocation3], 0
    %12 = vsyncpa [#allocation6], 0
    %13 = vsyncpa [#allocation9], 0
    %14 = vsyncpa [#allocation12], 0
    %15 = vsyncpa [#allocation4], 0
    // Predicated region
    $region2: #{tpu_custom_call.1} parent=1 // pred_check
      _
    $region3: #{tpu_custom_call.1} parent=1 // pred_check_branch
      %17 = sbr.rel (0) target = $region5
    $region4: #{tpu_custom_call.1} parent=1 // pred_region
      %19 = vsyncadd [#allocation3], 0
      %s20 = sshll.u32 %s0, 4
      %s21 = int_to_ptr.hbm [resolvable:$true] %s20
      %s22 = sshll.u32 [#allocation2], 4
      %s23 = int_to_ptr.vmem [resolvable:$true] %s22
      %28 = dma.hbm_to_vmem [thread:$0]  %s21, 512, %s23, [#allocation3], 128, 128, 8
    $region5: #{tpu_custom_call.1} parent=1 // pred_fallthru
      _
    // Predicated region
    $region6: #{tpu_custom_call.1} parent=1 // pred_check
      _
    $region7: #{tpu_custom_call.1} parent=1 // pred_check_branch
      %30 = sbr.rel (0) target = $region9
    $region8: #{tpu_custom_call.1} parent=1 // pred_region
      %32 = vsyncadd [#allocation6], 0
      %s33 = sshll.u32 %s1, 4
      %s34 = int_to_ptr.hbm [resolvable:$true] %s33
      %s35 = sshll.u32 [#allocation5], 4
      %s36 = int_to_ptr.vmem [resolvable:$true] %s35
      %41 = dma.hbm_to_vmem [thread:$0]  %s34, 512, %s36, [#allocation6], 128, 128, 8
    $region9: #{tpu_custom_call.1} parent=1 // pred_fallthru
      _
    // Predicated region
    $region10: #{tpu_custom_call.1} parent=1 // pred_check
      _
    $region11: #{tpu_custom_call.1} parent=1 // pred_check_branch
      %43 = sbr.rel (0) target = $region13
    $region12: #{tpu_custom_call.1} parent=1 // pred_region
      %45 = vsyncadd [#allocation6], 0
      %s46 = sshll.u32 %s2, 4
      %s47 = int_to_ptr.hbm [resolvable:$true] %s46
      %s48 = sshll.u32 [#allocation7], 4
      %s49 = int_to_ptr.vmem [resolvable:$true] %s48
      %54 = dma.hbm_to_vmem [thread:$0]  %s47, 512, %s49, [#allocation6], 128, 128, 8
    $region13: #{tpu_custom_call.1} parent=1 // pred_fallthru
      _
    // Predicated region
    $region14: #{tpu_custom_call.1} parent=1 // pred_check
      _
    $region15: #{tpu_custom_call.1} parent=1 // pred_check_branch
      %56 = sbr.rel (0) target = $region17
    $region16: #{tpu_custom_call.1} parent=1 // pred_region
      %58 = vsyncadd [#allocation9], 0
      %s59 = sshll.u32 %s3, 4
      %s60 = int_to_ptr.hbm [resolvable:$true] %s59
      %s61 = sshll.u32 [#allocation8], 4
      %s62 = int_to_ptr.vmem [resolvable:$true] %s61
      %67 = dma.hbm_to_vmem [thread:$0]  %s60, 512, %s62, [#allocation9], 128, 128, 8
    $region17: #{tpu_custom_call.1} parent=1 // pred_fallthru
      _
    // Predicated region
    $region18: #{tpu_custom_call.1} parent=1 // pred_check
      _
    $region19: #{tpu_custom_call.1} parent=1 // pred_check_branch
      %69 = sbr.rel (0) target = $region21
    $region20: #{tpu_custom_call.1} parent=1 // pred_region
      %71 = vsyncadd [#allocation9], 0
      %s72 = sshll.u32 %s4, 4
      %s73 = int_to_ptr.hbm [resolvable:$true] %s72
      %s74 = sshll.u32 [#allocation10], 4
      %s75 = int_to_ptr.vmem [resolvable:$true] %s74
      %80 = dma.hbm_to_vmem [thread:$0]  %s73, 512, %s75, [#allocation9], 128, 128, 8
    $region21: #{tpu_custom_call.1} parent=1 // pred_fallthru
      _
    // Predicated region
    $region22: #{tpu_custom_call.1} parent=1 // pred_check
      _
    $region23: #{tpu_custom_call.1} parent=1 // pred_check_branch
      %82 = sbr.rel (0) target = $region25
    $region24: #{tpu_custom_call.1} parent=1 // pred_region
      %84 = vsyncadd [#allocation12], 0
      %s85 = sshll.u32 %s5, 4
      %s86 = int_to_ptr.hbm [resolvable:$true] %s85
      %s87 = sshll.u32 [#allocation11], 4
      %s88 = int_to_ptr.vmem [resolvable:$true] %s87
      %93 = dma.hbm_to_vmem [thread:$0]  %s86, 256, %s88, [#allocation12], 128, 128, 8
    $region25: #{tpu_custom_call.1} parent=1 // pred_fallthru
      _
    // Predicated region
    $region26: #{tpu_custom_call.1} parent=1 // pred_check
      _
    $region27: #{tpu_custom_call.1} parent=1 // pred_check_branch
      %95 = sbr.rel (0) target = $region29
    $region28: #{tpu_custom_call.1} parent=1 // pred_region
      %97 = dma.done [#allocation3], 512
    $region29: #{tpu_custom_call.1} parent=1 // pred_fallthru
      _
    // Predicated region
    $region30: #{tpu_custom_call.1} parent=1 // pred_check
      _
    $region31: #{tpu_custom_call.1} parent=1 // pred_check_branch
      %99 = sbr.rel (0) target = $region33
    $region32: #{tpu_custom_call.1} parent=1 // pred_region
      %101 = dma.done [#allocation6], 512
    $region33: #{tpu_custom_call.1} parent=1 // pred_fallthru
      _
    // Predicated region
    $region34: #{tpu_custom_call.1} parent=1 // pred_check
      _
    $region35: #{tpu_custom_call.1} parent=1 // pred_check_branch
      %103 = sbr.rel (0) target = $region37
    $region36: #{tpu_custom_call.1} parent=1 // pred_region
      %105 = dma.done [#allocation6], 512
    $region37: #{tpu_custom_call.1} parent=1 // pred_fallthru
      _
    // Predicated region
    $region38: #{tpu_custom_call.1} parent=1 // pred_check
      _
    $region39: #{tpu_custom_call.1} parent=1 // pred_check_branch
      %107 = sbr.rel (0) target = $region41
    $region40: #{tpu_custom_call.1} parent=1 // pred_region
      %109 = dma.done [#allocation9], 512
    $region41: #{tpu_custom_call.1} parent=1 // pred_fallthru
      _
    // Predicated region
    $region42: #{tpu_custom_call.1} parent=1 // pred_check
      _
    $region43: #{tpu_custom_call.1} parent=1 // pred_check_branch
      %111 = sbr.rel (0) target = $region45
    $region44: #{tpu_custom_call.1} parent=1 // pred_region
      %113 = dma.done [#allocation9], 512
    $region45: #{tpu_custom_call.1} parent=1 // pred_fallthru
      _
    // Predicated region
    $region46: #{tpu_custom_call.1} parent=1 // pred_check
      _
    $region47: #{tpu_custom_call.1} parent=1 // pred_check_branch
      %115 = sbr.rel (0) target = $region49
    $region48: #{tpu_custom_call.1} parent=1 // pred_region
      %117 = dma.done [#allocation12], 256
    $region49: #{tpu_custom_call.1} parent=1 // pred_fallthru
      _
    %v118 = vld [vmem:[#allocation2] sm:$0xff]
    %v119 = vld [vmem:[#allocation2 + $0x8] sm:$0xff]
    %v120 = vld [vmem:[#allocation2 + $0x10] sm:$0xff]
    %v121 = vld [vmem:[#allocation2 + $0x18] sm:$0xff]
    %v122 = vld [vmem:[#allocation8] sm:$0xff]
    %v123 = vld [vmem:[#allocation8 + $0x8] sm:$0xff]
    %v124 = vld [vmem:[#allocation8 + $0x10] sm:$0xff]
    %v125 = vld [vmem:[#allocation8 + $0x18] sm:$0xff]
    %vm126 = vcmask 261120
    %v128 = vsel %vm126, %v118, 0
    %v131 = vsel %vm126, %v119, 0
    %v134 = vsel %vm126, %v120, 0
    %v137 = vsel %vm126, %v121, 0
    %139 = vmatpush.msra.mxu0 0.0
    %140 = vmatpush.msra.mxu0 0.0
    %141 = vmatpush.msra.mxu0 0.0
    %142 = vmatpush.msra.mxu0 0.0
    %143 = vmatpush.msra.mxu0 0.0
    %144 = vmatpush.msra.mxu0 0.0
    %145 = vmatpush.msra.mxu0 0.0
    %146 = vmatpush.msra.mxu0 0.0
    %147 = vmatpush.msra.mxu0 0.0
    %148 = vmatpush.msra.mxu0 0.0
    %149 = vmatpush.msra.mxu0 0.0
    %150 = vmatpush.msra.mxu0 0.0
    %151 = vmatpush.msra.mxu0 %v125
    %152 = vmatpush.msra.mxu0 %v124
    %153 = vmatpush.msra.mxu0 %v123
    %154 = vmatpush.msra.mxu0 %v122
    %155 = vmatmul.f32.gmra.mxu0 %v128
    %v156 = vpop.f32.mrf.mxu0
    %v157 = vadd.f32 0.0, %v156
    %158 = vmatmul.f32.gmra.mxu0 %v131
    %v159 = vpop.f32.mrf.mxu0
    %v160 = vadd.f32 0.0, %v159
    %161 = vmatmul.f32.gmra.mxu0 %v134
    %v162 = vpop.f32.mrf.mxu0
    %v163 = vadd.f32 0.0, %v162
    %164 = vmatmul.f32.gmra.mxu0 %v137
    %v165 = vpop.f32.mrf.mxu0
    %v166 = vadd.f32 0.0, %v165
    %167 = vdwg.mxu0
    %v168 = vld [vmem:[#allocation5] sm:$0xff]
    %v169 = vld [vmem:[#allocation5 + $0x8] sm:$0xff]
    %v170 = vld [vmem:[#allocation5 + $0x10] sm:$0xff]
    %v171 = vld [vmem:[#allocation5 + $0x18] sm:$0xff]
    %v172 = vld [vmem:[#allocation10] sm:$0xff]
    %v173 = vld [vmem:[#allocation10 + $0x8] sm:$0xff]
    %v174 = vld [vmem:[#allocation10 + $0x10] sm:$0xff]
    %v175 = vld [vmem:[#allocation10 + $0x18] sm:$0xff]
    %v177 = vsel %vm126, %v168, 0
    %v180 = vsel %vm126, %v169, 0
    %v183 = vsel %vm126, %v170, 0
    %v186 = vsel %vm126, %v171, 0
    %188 = vmatpush.msra.mxu0 0.0
    %189 = vmatpush.msra.mxu0 0.0
    %190 = vmatpush.msra.mxu0 0.0
    %191 = vmatpush.msra.mxu0 0.0
    %192 = vmatpush.msra.mxu0 0.0
    %193 = vmatpush.msra.mxu0 0.0
    %194 = vmatpush.msra.mxu0 0.0
    %195 = vmatpush.msra.mxu0 0.0
    %196 = vmatpush.msra.mxu0 0.0
    %197 = vmatpush.msra.mxu0 0.0
    %198 = vmatpush.msra.mxu0 0.0
    %199 = vmatpush.msra.mxu0 0.0
    %200 = vmatpush.msra.mxu0 %v175
    %201 = vmatpush.msra.mxu0 %v174
    %202 = vmatpush.msra.mxu0 %v173
    %203 = vmatpush.msra.mxu0 %v172
    %204 = vmatmul.f32.gmra.mxu0 %v177
    %v205 = vpop.f32.mrf.mxu0
    %v206 = vadd.f32 0.0, %v205
    %207 = vmatmul.f32.gmra.mxu0 %v180
    %v208 = vpop.f32.mrf.mxu0
    %v209 = vadd.f32 0.0, %v208
    %210 = vmatmul.f32.gmra.mxu0 %v183
    %v211 = vpop.f32.mrf.mxu0
    %v212 = vadd.f32 0.0, %v211
    %213 = vmatmul.f32.gmra.mxu0 %v186
    %v214 = vpop.f32.mrf.mxu0
    %v215 = vadd.f32 0.0, %v214
    %216 = vdwg.mxu0
    %v217 = vld [vmem:[#allocation7] sm:$0xff]
    %v218 = vld [vmem:[#allocation7 + $0x8] sm:$0xff]
    %v219 = vld [vmem:[#allocation7 + $0x10] sm:$0xff]
    %v220 = vld [vmem:[#allocation7 + $0x18] sm:$0xff]
    %v221 = vld [vmem:[#allocation11] sm:$0xff]
    %v222 = vld [vmem:[#allocation11 + $0x8] sm:$0xff]
    %vm223 = vcmask 130048
    %v225 = vsel %vm223, %v217, 0
    %v228 = vsel %vm223, %v218, 0
    %v231 = vsel %vm223, %v219, 0
    %v234 = vsel %vm223, %v220, 0
    %236 = vmatpush.msra.mxu0 0.0
    %237 = vmatpush.msra.mxu0 0.0
    %238 = vmatpush.msra.mxu0 0.0
    %239 = vmatpush.msra.mxu0 0.0
    %240 = vmatpush.msra.mxu0 0.0
    %241 = vmatpush.msra.mxu0 0.0
    %242 = vmatpush.msra.mxu0 0.0
    %243 = vmatpush.msra.mxu0 0.0
    %244 = vmatpush.msra.mxu0 0.0
    %245 = vmatpush.msra.mxu0 0.0
    %246 = vmatpush.msra.mxu0 0.0
    %247 = vmatpush.msra.mxu0 0.0
    %248 = vmatpush.msra.mxu0 0.0
    %249 = vmatpush.msra.mxu0 0.0
    %250 = vmatpush.msra.mxu0 %v222
    %251 = vmatpush.msra.mxu0 %v221
    %252 = vmatmul.f32.gmra.mxu0 %v225
    %v253 = vpop.f32.mrf.mxu0
    %v254 = vadd.f32 0.0, %v253
    %255 = vmatmul.f32.gmra.mxu0 %v228
    %v256 = vpop.f32.mrf.mxu0
    %v257 = vadd.f32 0.0, %v256
    %258 = vmatmul.f32.gmra.mxu0 %v231
    %v259 = vpop.f32.mrf.mxu0
    %v260 = vadd.f32 0.0, %v259
    %261 = vmatmul.f32.gmra.mxu0 %v234
    %v262 = vpop.f32.mrf.mxu0
    %v263 = vadd.f32 0.0, %v262
    %264 = vdwg.mxu0
    %265 = vmatpush.xpose.msra.mxu0 0.0
    %266 = vmatpush.xpose.msra.mxu0 0.0
    %267 = vmatpush.xpose.msra.mxu0 0.0
    %268 = vmatpush.xpose.msra.mxu0 0.0
    %269 = vmatpush.xpose.msra.mxu0 0.0
    %270 = vmatpush.xpose.msra.mxu0 0.0
    %271 = vmatpush.xpose.msra.mxu0 0.0
    %272 = vmatpush.xpose.msra.mxu0 0.0
    %273 = vmatpush.xpose.msra.mxu0 0.0
    %274 = vmatpush.xpose.msra.mxu0 0.0
    %275 = vmatpush.xpose.msra.mxu0 0.0
    %276 = vmatpush.xpose.msra.mxu0 0.0
    %277 = vmatpush.xpose.msra.mxu0 0.0
    %278 = vmatpush.xpose.msra.mxu0 0.0
    %279 = vmatpush.xpose.msra.mxu0 0.0
    %280 = vmatpush.xpose.msra.mxu0 %v206
    %281 = vmatmul.f32.gmra.mxu0 %v157
    %v282 = vpop.f32.mrf.mxu0
    %v283 = vadd.f32 0.0, %v282
    %284 = vdwg.mxu0
    %285 = vmatpush.xpose.msra.mxu0 0.0
    %286 = vmatpush.xpose.msra.mxu0 0.0
    %287 = vmatpush.xpose.msra.mxu0 0.0
    %288 = vmatpush.xpose.msra.mxu0 0.0
    %289 = vmatpush.xpose.msra.mxu0 0.0
    %290 = vmatpush.xpose.msra.mxu0 0.0
    %291 = vmatpush.xpose.msra.mxu0 0.0
    %292 = vmatpush.xpose.msra.mxu0 0.0
    %293 = vmatpush.xpose.msra.mxu0 0.0
    %294 = vmatpush.xpose.msra.mxu0 0.0
    %295 = vmatpush.xpose.msra.mxu0 0.0
    %296 = vmatpush.xpose.msra.mxu0 0.0
    %297 = vmatpush.xpose.msra.mxu0 0.0
    %298 = vmatpush.xpose.msra.mxu0 0.0
    %299 = vmatpush.xpose.msra.mxu0 0.0
    %300 = vmatpush.xpose.msra.mxu0 %v209
    %301 = vmatmul.f32.gmra.mxu0 %v160
    %v302 = vpop.f32.mrf.mxu0
    %v303 = vadd.f32 0.0, %v302
    %304 = vdwg.mxu0
    %305 = vmatpush.xpose.msra.mxu0 0.0
    %306 = vmatpush.xpose.msra.mxu0 0.0
    %307 = vmatpush.xpose.msra.mxu0 0.0
    %308 = vmatpush.xpose.msra.mxu0 0.0
    %309 = vmatpush.xpose.msra.mxu0 0.0
    %310 = vmatpush.xpose.msra.mxu0 0.0
    %311 = vmatpush.xpose.msra.mxu0 0.0
    %312 = vmatpush.xpose.msra.mxu0 0.0
    %313 = vmatpush.xpose.msra.mxu0 0.0
    %314 = vmatpush.xpose.msra.mxu0 0.0
    %315 = vmatpush.xpose.msra.mxu0 0.0
    %316 = vmatpush.xpose.msra.mxu0 0.0
    %317 = vmatpush.xpose.msra.mxu0 0.0
    %318 = vmatpush.xpose.msra.mxu0 0.0
    %319 = vmatpush.xpose.msra.mxu0 0.0
    %320 = vmatpush.xpose.msra.mxu0 %v212
    %321 = vmatmul.f32.gmra.mxu0 %v163
    %v322 = vpop.f32.mrf.mxu0
    %v323 = vadd.f32 0.0, %v322
    %324 = vdwg.mxu0
    %325 = vmatpush.xpose.msra.mxu0 0.0
    %326 = vmatpush.xpose.msra.mxu0 0.0
    %327 = vmatpush.xpose.msra.mxu0 0.0
    %328 = vmatpush.xpose.msra.mxu0 0.0
    %329 = vmatpush.xpose.msra.mxu0 0.0
    %330 = vmatpush.xpose.msra.mxu0 0.0
    %331 = vmatpush.xpose.msra.mxu0 0.0
    %332 = vmatpush.xpose.msra.mxu0 0.0
    %333 = vmatpush.xpose.msra.mxu0 0.0
    %334 = vmatpush.xpose.msra.mxu0 0.0
    %335 = vmatpush.xpose.msra.mxu0 0.0
    %336 = vmatpush.xpose.msra.mxu0 0.0
    %337 = vmatpush.xpose.msra.mxu0 0.0
    %338 = vmatpush.xpose.msra.mxu0 0.0
    %339 = vmatpush.xpose.msra.mxu0 0.0
    %340 = vmatpush.xpose.msra.mxu0 %v215
    %341 = vmatmul.f32.gmra.mxu0 %v166
    %v342 = vpop.f32.mrf.mxu0
    %v343 = vadd.f32 0.0, %v342
    %344 = vdwg.mxu0
    %v345 = vmul.f32 %v283, 0.17677669
    %v346 = vmul.f32 %v303, 0.17677669
    %v347 = vmul.f32 %v323, 0.17677669
    %v348 = vmul.f32 %v343, 0.17677669
    %vm349 = vcmask 64512
    %v350 = vsel %vm349, %v345, -inf
    %v351 = vrot.slane %v350, 4
    %v352 = vmax.f32 %v350, %v351
    %v353 = vrot.slane %v352, 2
    %v354 = vmax.f32 %v352, %v353
    %v355 = vrot.slane %v354, 1
    %v356 = vmax.f32 %v354, %v355
    %v357 = vsel %vm349, %v346, -inf
    %v358 = vrot.slane %v357, 4
    %v359 = vmax.f32 %v357, %v358
    %v360 = vrot.slane %v359, 2
    %v361 = vmax.f32 %v359, %v360
    %v362 = vrot.slane %v361, 1
    %v363 = vmax.f32 %v361, %v362
    %v364 = vsel %vm349, %v347, -inf
    %v365 = vrot.slane %v364, 4
    %v366 = vmax.f32 %v364, %v365
    %v367 = vrot.slane %v366, 2
    %v368 = vmax.f32 %v366, %v367
    %v369 = vrot.slane %v368, 1
    %v370 = vmax.f32 %v368, %v369
    %v371 = vsel %vm349, %v348, -inf
    %v372 = vrot.slane %v371, 4
    %v373 = vmax.f32 %v371, %v372
    %v374 = vrot.slane %v373, 2
    %v375 = vmax.f32 %v373, %v374
    %v376 = vrot.slane %v375, 1
    %v377 = vmax.f32 %v375, %v376
    %v378 = vsub.f32 %v345, %v356
    %v379 = vsub.f32 %v346, %v363
    %v380 = vsub.f32 %v347, %v370
    %v381 = vsub.f32 %v348, %v377
    %v382 = vmul.f32 %v378, 1.442695
    %v383 = vpow.pop %v382
    %v384 = vmul.f32 %v379, 1.442695
    %v385 = vpow.pop %v384
    %v386 = vmul.f32 %v380, 1.442695
    %v387 = vpow.pop %v386
    %v388 = vmul.f32 %v381, 1.442695
    %v389 = vpow.pop %v388
    %v390 = vsel %vm349, %v383, 0.0
    %v391 = vrot.slane %v390, 4
    %v392 = vadd.f32 %v390, %v391
    %v393 = vrot.slane %v392, 2
    %v394 = vadd.f32 %v392, %v393
    %v395 = vrot.slane %v394, 1
    %v396 = vadd.f32 %v394, %v395
    %v397 = vsel %vm349, %v385, 0.0
    %v398 = vrot.slane %v397, 4
    %v399 = vadd.f32 %v397, %v398
    %v400 = vrot.slane %v399, 2
    %v401 = vadd.f32 %v399, %v400
    %v402 = vrot.slane %v401, 1
    %v403 = vadd.f32 %v401, %v402
    %v404 = vsel %vm349, %v387, 0.0
    %v405 = vrot.slane %v404, 4
    %v406 = vadd.f32 %v404, %v405
    %v407 = vrot.slane %v406, 2
    %v408 = vadd.f32 %v406, %v407
    %v409 = vrot.slane %v408, 1
    %v410 = vadd.f32 %v408, %v409
    %v411 = vsel %vm349, %v389, 0.0
    %v412 = vrot.slane %v411, 4
    %v413 = vadd.f32 %v411, %v412
    %v414 = vrot.slane %v413, 2
    %v415 = vadd.f32 %v413, %v414
    %v416 = vrot.slane %v415, 1
    %v417 = vadd.f32 %v415, %v416
    %v418 = vrcp.pop %v396
    %v419 = vrcp.pop %v403
    %v420 = vrcp.pop %v410
    %v421 = vrcp.pop %v417
    %v422 = vmul.f32 %v383, %v418
    %v423 = vmul.f32 %v385, %v419
    %v424 = vmul.f32 %v387, %v420
    %v425 = vmul.f32 %v389, %v421
    %v427 = vsel %vm349, %v422, 0
    %429 = vmatpush.msra.mxu0 0.0
    %430 = vmatpush.msra.mxu0 0.0
    %431 = vmatpush.msra.mxu0 0.0
    %432 = vmatpush.msra.mxu0 0.0
    %433 = vmatpush.msra.mxu0 0.0
    %434 = vmatpush.msra.mxu0 0.0
    %435 = vmatpush.msra.mxu0 0.0
    %436 = vmatpush.msra.mxu0 0.0
    %437 = vmatpush.msra.mxu0 0.0
    %438 = vmatpush.msra.mxu0 0.0
    %439 = vmatpush.msra.mxu0 0.0
    %440 = vmatpush.msra.mxu0 0.0
    %441 = vmatpush.msra.mxu0 0.0
    %442 = vmatpush.msra.mxu0 0.0
    %443 = vmatpush.msra.mxu0 0.0
    %444 = vmatpush.msra.mxu0 %v254
    %445 = vmatmul.f32.gmra.mxu0 %v427
    %v446 = vpop.f32.mrf.mxu0
    %v447 = vadd.f32 0.0, %v446
    %448 = vdwg.mxu0
    %v450 = vsel %vm349, %v423, 0
    %452 = vmatpush.msra.mxu0 0.0
    %453 = vmatpush.msra.mxu0 0.0
    %454 = vmatpush.msra.mxu0 0.0
    %455 = vmatpush.msra.mxu0 0.0
    %456 = vmatpush.msra.mxu0 0.0
    %457 = vmatpush.msra.mxu0 0.0
    %458 = vmatpush.msra.mxu0 0.0
    %459 = vmatpush.msra.mxu0 0.0
    %460 = vmatpush.msra.mxu0 0.0
    %461 = vmatpush.msra.mxu0 0.0
    %462 = vmatpush.msra.mxu0 0.0
    %463 = vmatpush.msra.mxu0 0.0
    %464 = vmatpush.msra.mxu0 0.0
    %465 = vmatpush.msra.mxu0 0.0
    %466 = vmatpush.msra.mxu0 0.0
    %467 = vmatpush.msra.mxu0 %v257
    %468 = vmatmul.f32.gmra.mxu0 %v450
    %v469 = vpop.f32.mrf.mxu0
    %v470 = vadd.f32 0.0, %v469
    %471 = vdwg.mxu0
    %v473 = vsel %vm349, %v424, 0
    %475 = vmatpush.msra.mxu0 0.0
    %476 = vmatpush.msra.mxu0 0.0
    %477 = vmatpush.msra.mxu0 0.0
    %478 = vmatpush.msra.mxu0 0.0
    %479 = vmatpush.msra.mxu0 0.0
    %480 = vmatpush.msra.mxu0 0.0
    %481 = vmatpush.msra.mxu0 0.0
    %482 = vmatpush.msra.mxu0 0.0
    %483 = vmatpush.msra.mxu0 0.0
    %484 = vmatpush.msra.mxu0 0.0
    %485 = vmatpush.msra.mxu0 0.0
    %486 = vmatpush.msra.mxu0 0.0
    %487 = vmatpush.msra.mxu0 0.0
    %488 = vmatpush.msra.mxu0 0.0
    %489 = vmatpush.msra.mxu0 0.0
    %490 = vmatpush.msra.mxu0 %v260
    %491 = vmatmul.f32.gmra.mxu0 %v473
    %v492 = vpop.f32.mrf.mxu0
    %v493 = vadd.f32 0.0, %v492
    %494 = vdwg.mxu0
    %v496 = vsel %vm349, %v425, 0
    %498 = vmatpush.msra.mxu0 0.0
    %499 = vmatpush.msra.mxu0 0.0
    %500 = vmatpush.msra.mxu0 0.0
    %501 = vmatpush.msra.mxu0 0.0
    %502 = vmatpush.msra.mxu0 0.0
    %503 = vmatpush.msra.mxu0 0.0
    %504 = vmatpush.msra.mxu0 0.0
    %505 = vmatpush.msra.mxu0 0.0
    %506 = vmatpush.msra.mxu0 0.0
    %507 = vmatpush.msra.mxu0 0.0
    %508 = vmatpush.msra.mxu0 0.0
    %509 = vmatpush.msra.mxu0 0.0
    %510 = vmatpush.msra.mxu0 0.0
    %511 = vmatpush.msra.mxu0 0.0
    %512 = vmatpush.msra.mxu0 0.0
    %513 = vmatpush.msra.mxu0 %v263
    %514 = vmatmul.f32.gmra.mxu0 %v496
    %v515 = vpop.f32.mrf.mxu0
    %v516 = vadd.f32 0.0, %v515
    %517 = vdwg.mxu0
    %518 = vst [vmem:[#allocation13] sm:$0xff] %v447
    %519 = vst [vmem:[#allocation13 + $0x8] sm:$0xff] %v470
    %520 = vst [vmem:[#allocation13 + $0x10] sm:$0xff] %v493
    %521 = vst [vmem:[#allocation13 + $0x18] sm:$0xff] %v516
    // Predicated region
    $region50: #{tpu_custom_call.1} parent=1 // pred_check
      _
    $region51: #{tpu_custom_call.1} parent=1 // pred_check_branch
      %523 = sbr.rel (0) target = $region53
    $region52: #{tpu_custom_call.1} parent=1 // pred_region
      %525 = vsyncadd [#allocation4], 0
      %s526 = sshll.u32 [#allocation13], 4
      %s527 = int_to_ptr.vmem [resolvable:$true] %s526
      %s528 = sshll.u32 %s6, 4
      %s529 = int_to_ptr.hbm [resolvable:$true] %s528
      %534 = dma.vmem_to_hbm [thread:$0]  %s527, 512, %s529, [#allocation4], 128, 128, 8
    $region53: #{tpu_custom_call.1} parent=1 // pred_fallthru
      _
    // Predicated region
    $region54: #{tpu_custom_call.1} parent=1 // pred_check
      _
    $region55: #{tpu_custom_call.1} parent=1 // pred_check_branch
      %536 = sbr.rel (0) target = $region57
    $region56: #{tpu_custom_call.1} parent=1 // pred_region
      %538 = dma.done [#allocation4], 512
    $region57: #{tpu_custom_call.1} parent=1 // pred_fallthru
      _
    %539 = vsyncpa [#allocation3], 1
    %540 = vsyncpa [#allocation6], 1
    %541 = vsyncpa [#allocation9], 1
    %542 = vsyncpa [#allocation12], 1
    %543 = vsyncpa [#allocation4], 1

</llo_original>
